<compile_context>
chip_gen: v7x
topology: tpu7x:2x2x1
jax: 0.10.0
libtpu: 0.0.40
codegen_flags: <defaults>
</compile_context>

<pallas_src>
import jax
import jax.numpy as jnp
from jax.experimental import pallas as pl
from jax.experimental.pallas import tpu as pltpu


def _round_up(x, m):
    return ((x + m - 1) // m) * m


def classification_head_kernel(x0_ref, x1_ref, x2_ref,
                               w0_ref, w1_ref, w2_ref,
                               b_ref, o_ref):
    # x*_ref: (TILE_B, num_unit)   w*_ref: (num_unit, out_dim)   b_ref: (1, out_dim)
    # o_ref : (TILE_B, out_dim)
    acc = jnp.dot(x0_ref[...], w0_ref[...], preferred_element_type=jnp.float32)
    acc += jnp.dot(x1_ref[...], w1_ref[...], preferred_element_type=jnp.float32)
    acc += jnp.dot(x2_ref[...], w2_ref[...], preferred_element_type=jnp.float32)
    o_ref[...] = (acc + b_ref[...]).astype(o_ref.dtype)


def prepare_params(weight, bias, num_unit):
    """One-time (parameter-load-time) weight/bias preparation — NOT in the hot path.

    weight: (output_dim, 3*num_unit)  PyTorch nn.Linear layout
    bias  : (output_dim,)
    Returns three (num_unit, output_dim) transposed weight chunks and a (1, output_dim) bias.
    No lane padding: the op is HBM/overhead-bound, so real (unpadded) transfers win.
    """
    out_dim, k_total = weight.shape
    assert k_total == 3 * num_unit
    w_chunks = tuple(
        weight[:, c * num_unit:(c + 1) * num_unit].T.astype(jnp.float32)  # (num_unit, out_dim)
        for c in range(3)
    )
    b_row = bias.reshape(1, out_dim).astype(jnp.float32)
    return w_chunks, b_row


def _choose_tile_b(B, tile_b):
    # Multiple of 8 sublanes; never bigger than needed for the whole batch.
    tile_b = min(tile_b, _round_up(B, 8))
    # v7x has 2 TensorCores: when B is large enough that splitting beats the ~0.35 us
    # per-grid-step overhead, size the tile so the "parallel" batch axis has >= 2 steps.
    if B >= 1024:
        tile_b = min(tile_b, _round_up((B + 1) // 2, 8))
    return tile_b


def classification_head(xs, w_chunks, b_row, *, tile_b=2048):
    """xs: tuple of 3 arrays, each (B, num_unit).  w_chunks/b_row from prepare_params.
    Returns (B, out_dim) directly (no padded buffer, no wrapper slice)."""
    x0, x1, x2 = xs
    B, k = x0.shape
    out_dim = b_row.shape[1]

    tile_b = _choose_tile_b(B, tile_b)
    grid_b = pl.cdiv(B, tile_b)

    # Real (unpadded) cost numbers so XLA schedules this micro-op sensibly.
    flops = 2 * B * (3 * k) * out_dim
    bytes_accessed = 4 * (B * 3 * k + 3 * k * out_dim + out_dim + B * out_dim)

    x_spec = pl.BlockSpec((tile_b, k), lambda i: (i, 0))
    w_spec = pl.BlockSpec((k, out_dim), lambda i: (0, 0))   # resident across batch tiles
    b_spec = pl.BlockSpec((1, out_dim), lambda i: (0, 0))

    out = pl.pallas_call(
        classification_head_kernel,
        out_shape=jax.ShapeDtypeStruct((B, out_dim), jnp.float32),
        grid_spec=pltpu.PrefetchScalarGridSpec(
            num_scalar_prefetch=0,
            grid=(grid_b,),
            in_specs=[x_spec, x_spec, x_spec, w_spec, w_spec, w_spec, b_spec],
            out_specs=pl.BlockSpec((tile_b, out_dim), lambda i: (i, 0)),
        ),
        compiler_params=pltpu.CompilerParams(
            dimension_semantics=("parallel",),
            vmem_limit_bytes=32 * 1024 * 1024,
        ),
        cost_estimate=pl.CostEstimate(
            flops=flops, transcendentals=0, bytes_accessed=bytes_accessed),
    )(x0, x1, x2, *w_chunks, b_row)

    # nn.Dropout(dropout_rate): identity at inference time (module.eval()).
    # TODO(synk): training-mode dropout (pltpu.prng_seed + pltpu.stateful_bernoulli mask
    # with 1/(1-p) scaling) could be fused into the kernel epilogue if needed.
    return out


if __name__ == "__main__":
    # Module hyperparameters from the source file.
    num_unit = 100
    output_dim = 5
    batch = 64  # batch_size in the source

    key = jax.random.PRNGKey(0)
    k_w, k_b, k_x0, k_x1, k_x2 = jax.random.split(key, 5)

    # nn.init.normal_(self.linear.weight, std=0.02)
    weight = 0.02 * jax.random.normal(k_w, (output_dim, num_unit * 3), jnp.float32)
    # nn.init.normal_(self.linear.bias, 0)  -> N(0, 1)
    bias = jax.random.normal(k_b, (output_dim,), jnp.float32)

    # One-time parameter preparation (outside the forward hot path).
    w_chunks, b_row = prepare_params(weight, bias, num_unit)

    # forward input: a tuple of 3 tensors, each (batch, num_unit)
    xs = (
        jax.random.normal(k_x0, (batch, num_unit), jnp.float32),
        jax.random.normal(k_x1, (batch, num_unit), jnp.float32),
        jax.random.normal(k_x2, (batch, num_unit), jnp.float32),
    )

    out = classification_head(xs, w_chunks, b_row)
    out = jax.block_until_ready(out)

    ref = jnp.concatenate(xs, axis=1) @ weight.T + bias
    assert out.shape == (batch, output_dim)
    assert jnp.allclose(out, ref, atol=1e-4, rtol=1e-4)

    # Boundary check: B not a multiple of 8 (partial-tile masking path).
    xs_odd = tuple(x[:60] for x in xs)
    out_odd = jax.block_until_ready(classification_head(xs_odd, w_chunks, b_row))
    ref_odd = jnp.concatenate(xs_odd, axis=1) @ weight.T + bias
    assert out_odd.shape == (60, output_dim)
    assert jnp.allclose(out_odd, ref_odd, atol=1e-4, rtol=1e-4)

    print("KERNEL_OK")
</pallas_src>

<mosaic_0001>
module attributes {stable_mosaic.version = 11 : i64} {
  func.func @classification_head_kernel(%arg0: i32, %arg1: memref<64x100xf32, #tpu.memory_space<vmem>>, %arg2: memref<64x100xf32, #tpu.memory_space<vmem>>, %arg3: memref<64x100xf32, #tpu.memory_space<vmem>>, %arg4: memref<100x5xf32, #tpu.memory_space<vmem>>, %arg5: memref<100x5xf32, #tpu.memory_space<vmem>>, %arg6: memref<100x5xf32, #tpu.memory_space<vmem>>, %arg7: memref<1x5xf32, #tpu.memory_space<vmem>>, %arg8: memref<64x5xf32, #tpu.memory_space<vmem>>) attributes {dimension_semantics = [#tpu.dimension_semantics<parallel>], iteration_bounds = array<i64: 1>, scalar_prefetch = 0 : i64, scratch_operands = 0 : i64, tpu.core_type = #tpu.core_type<tc>, window_params = [{transform_indices = @transform_0, window_bounds = array<i64: 64, 100>}, {transform_indices = @transform_1, window_bounds = array<i64: 64, 100>}, {transform_indices = @transform_2, window_bounds = array<i64: 64, 100>}, {pipeline_mode = #tpu.pipeline_mode<synchronous>, transform_indices = @transform_3, window_bounds = array<i64: 100, 5>}, {pipeline_mode = #tpu.pipeline_mode<synchronous>, transform_indices = @transform_4, window_bounds = array<i64: 100, 5>}, {pipeline_mode = #tpu.pipeline_mode<synchronous>, transform_indices = @transform_5, window_bounds = array<i64: 100, 5>}, {pipeline_mode = #tpu.pipeline_mode<synchronous>, transform_indices = @transform_6, window_bounds = array<i64: 1, 5>}, {transform_indices = @transform_7, window_bounds = array<i64: 64, 5>}]} {
    %c0 = arith.constant 0 : index
    %c0_0 = arith.constant 0 : index
    %0 = vector.load %arg1[%c0, %c0_0] : memref<64x100xf32, #tpu.memory_space<vmem>>, vector<64x100xf32>
    %c0_1 = arith.constant 0 : index
    %c0_2 = arith.constant 0 : index
    %1 = vector.load %arg4[%c0_1, %c0_2] : memref<100x5xf32, #tpu.memory_space<vmem>>, vector<100x5xf32>
    %cst = arith.constant dense<0.000000e+00> : vector<64x5xf32>
    %2 = tpu.matmul %0, %1, %cst {dimension_numbers = #tpu.dot_dimension_numbers<[1], [0], [0], [1], [0, 0, 1, 1], [], []>} : vector<64x100xf32>, vector<100x5xf32>, vector<64x5xf32> -> vector<64x5xf32>
    %c0_3 = arith.constant 0 : index
    %c0_4 = arith.constant 0 : index
    %3 = vector.load %arg2[%c0_3, %c0_4] : memref<64x100xf32, #tpu.memory_space<vmem>>, vector<64x100xf32>
    %c0_5 = arith.constant 0 : index
    %c0_6 = arith.constant 0 : index
    %4 = vector.load %arg5[%c0_5, %c0_6] : memref<100x5xf32, #tpu.memory_space<vmem>>, vector<100x5xf32>
    %cst_7 = arith.constant dense<0.000000e+00> : vector<64x5xf32>
    %5 = tpu.matmul %3, %4, %cst_7 {dimension_numbers = #tpu.dot_dimension_numbers<[1], [0], [0], [1], [0, 0, 1, 1], [], []>} : vector<64x100xf32>, vector<100x5xf32>, vector<64x5xf32> -> vector<64x5xf32>
    %6 = arith.addf %2, %5 : vector<64x5xf32>
    %c0_8 = arith.constant 0 : index
    %c0_9 = arith.constant 0 : index
    %7 = vector.load %arg3[%c0_8, %c0_9] : memref<64x100xf32, #tpu.memory_space<vmem>>, vector<64x100xf32>
    %c0_10 = arith.constant 0 : index
    %c0_11 = arith.constant 0 : index
    %8 = vector.load %arg6[%c0_10, %c0_11] : memref<100x5xf32, #tpu.memory_space<vmem>>, vector<100x5xf32>
    %cst_12 = arith.constant dense<0.000000e+00> : vector<64x5xf32>
    %9 = tpu.matmul %7, %8, %cst_12 {dimension_numbers = #tpu.dot_dimension_numbers<[1], [0], [0], [1], [0, 0, 1, 1], [], []>} : vector<64x100xf32>, vector<100x5xf32>, vector<64x5xf32> -> vector<64x5xf32>
    %10 = arith.addf %6, %9 : vector<64x5xf32>
    %c0_13 = arith.constant 0 : index
    %c0_14 = arith.constant 0 : index
    %11 = vector.load %arg7[%c0_13, %c0_14] : memref<1x5xf32, #tpu.memory_space<vmem>>, vector<1x5xf32>
    %12 = vector.broadcast %11 : vector<1x5xf32> to vector<64x5xf32>
    %13 = arith.addf %10, %12 : vector<64x5xf32>
    %c0_15 = arith.constant 0 : index
    %c0_16 = arith.constant 0 : index
    %14 = vector.load %arg8[%c0_15, %c0_16] : memref<64x5xf32, #tpu.memory_space<vmem>>, vector<64x5xf32>
    tpu.vector_store %arg8[%c0_15, %c0_16], %13 {strides = array<i32>} : memref<64x5xf32, #tpu.memory_space<vmem>>, vector<64x5xf32>,
    return
  }
  func.func @transform_0(%arg0: i32) -> (i32, i32) {
    %c0_i32 = arith.constant 0 : i32
    %c0_i32_0 = arith.constant 0 : i32
    return %arg0, %c0_i32 : i32, i32
  }
  func.func @transform_1(%arg0: i32) -> (i32, i32) {
    %c0_i32 = arith.constant 0 : i32
    %c0_i32_0 = arith.constant 0 : i32
    return %arg0, %c0_i32 : i32, i32
  }
  func.func @transform_2(%arg0: i32) -> (i32, i32) {
    %c0_i32 = arith.constant 0 : i32
    %c0_i32_0 = arith.constant 0 : i32
    return %arg0, %c0_i32 : i32, i32
  }
  func.func @transform_3(%arg0: i32) -> (i32, i32) {
    %c0_i32 = arith.constant 0 : i32
    %c0_i32_0 = arith.constant 0 : i32
    %c0_i32_1 = arith.constant 0 : i32
    return %c0_i32, %c0_i32_0 : i32, i32
  }
  func.func @transform_4(%arg0: i32) -> (i32, i32) {
    %c0_i32 = arith.constant 0 : i32
    %c0_i32_0 = arith.constant 0 : i32
    %c0_i32_1 = arith.constant 0 : i32
    return %c0_i32, %c0_i32_0 : i32, i32
  }
  func.func @transform_5(%arg0: i32) -> (i32, i32) {
    %c0_i32 = arith.constant 0 : i32
    %c0_i32_0 = arith.constant 0 : i32
    %c0_i32_1 = arith.constant 0 : i32
    return %c0_i32, %c0_i32_0 : i32, i32
  }
  func.func @transform_6(%arg0: i32) -> (i32, i32) {
    %c0_i32 = arith.constant 0 : i32
    %c0_i32_0 = arith.constant 0 : i32
    %c0_i32_1 = arith.constant 0 : i32
    return %c0_i32, %c0_i32_0 : i32, i32
  }
  func.func @transform_7(%arg0: i32) -> (i32, i32) {
    %c0_i32 = arith.constant 0 : i32
    %c0_i32_0 = arith.constant 0 : i32
    return %arg0, %c0_i32 : i32, i32
  }
}

</mosaic_0001>

<llo_original>
// kernel: tpu_custom_call.1
$region0: #{tpu_custom_call.1}
  #allocation0 [shape = 'u32[]', space=smem, size = 0x4, offset = 0x4, fixed_abs, tag = 'smem constant byte address 0x4 - core index']
  #allocation1 [shape = 'u32[144,128]{1,0:T(1,128)}', space=vmem, size = 0x12000, scoped, tag = 'internal scratch']
  %s0 = inlined_call_operand.vmem [shape: f32[64,100], index: 0, kind: input, shape index: {}]
  %s1 = inlined_call_operand.vmem [shape: f32[64,100], index: 1, kind: input, shape index: {}]
  %s2 = inlined_call_operand.vmem [shape: f32[64,100], index: 2, kind: input, shape index: {}]
  %s3 = inlined_call_operand.vmem [shape: f32[100,5], index: 3, kind: input, shape index: {}]
  %s4 = inlined_call_operand.vmem [shape: f32[100,5], index: 4, kind: input, shape index: {}]
  %s5 = inlined_call_operand.vmem [shape: f32[100,5], index: 5, kind: input, shape index: {}]
  %s6 = inlined_call_operand.vmem [shape: f32[1,5], index: 6, kind: input, shape index: {}]
  %s7 = inlined_call_operand.vmem [shape: f32[64,5], index: 7, kind: output, shape index: {}]
  %s8 = sld [smem:[#allocation0]]
  $region38: #{tpu_custom_call.1} parent=0
    _
  %s10 = ssub.s32 1, %s8
  %s11 = scalar_select 0, %s10, %s8
  // Predicated region
  $region2: #{tpu_custom_call.1} parent=0 // pred_check
    _
  $region3: #{tpu_custom_call.1} parent=0 // pred_check_branch
    %13 = sbr.rel (0) target = $region5
  $region4: #{tpu_custom_call.1} parent=0 // pred_region
    _
  $region5: #{tpu_custom_call.1} parent=0 // pred_fallthru
    _
  // Predicated region
  $region6: #{tpu_custom_call.1} parent=0 // pred_check
    _
  $region7: #{tpu_custom_call.1} parent=0 // pred_check_branch
    %15 = sbr.rel (0) target = $region9
  $region8: #{tpu_custom_call.1} parent=0 // pred_region
    _
  $region9: #{tpu_custom_call.1} parent=0 // pred_fallthru
    _
  // Predicated region
  $region10: #{tpu_custom_call.1} parent=0 // pred_check
    _
  $region11: #{tpu_custom_call.1} parent=0 // pred_check_branch
    %17 = sbr.rel (0) target = $region13
  $region12: #{tpu_custom_call.1} parent=0 // pred_region
    _
  $region13: #{tpu_custom_call.1} parent=0 // pred_fallthru
    _
  // Predicated region
  $region14: #{tpu_custom_call.1} parent=0 // pred_check
    _
  $region15: #{tpu_custom_call.1} parent=0 // pred_check_branch
    %19 = sbr.rel (0) target = $region17
  $region16: #{tpu_custom_call.1} parent=0 // pred_region
    _
  $region17: #{tpu_custom_call.1} parent=0 // pred_fallthru
    _
  // Predicated region
  $region18: #{tpu_custom_call.1} parent=0 // pred_check
    _
  $region19: #{tpu_custom_call.1} parent=0 // pred_check_branch
    %21 = sbr.rel (0) target = $region21
  $region20: #{tpu_custom_call.1} parent=0 // pred_region
    _
  $region21: #{tpu_custom_call.1} parent=0 // pred_fallthru
    _
  // Predicated region
  $region22: #{tpu_custom_call.1} parent=0 // pred_check
    _
  $region23: #{tpu_custom_call.1} parent=0 // pred_check_branch
    %23 = sbr.rel (0) target = $region25
  $region24: #{tpu_custom_call.1} parent=0 // pred_region
    _
  $region25: #{tpu_custom_call.1} parent=0 // pred_fallthru
    _
  // Predicated region
  $region26: #{tpu_custom_call.1} parent=0 // pred_check
    _
  $region27: #{tpu_custom_call.1} parent=0 // pred_check_branch
    %25 = sbr.rel (0) target = $region29
  $region28: #{tpu_custom_call.1} parent=0 // pred_region
    _
  $region29: #{tpu_custom_call.1} parent=0 // pred_fallthru
    _
  %v26 = vld [vmem:[%s0] sm:$0xff]
  %v27 = vld [vmem:[%s0 + $0x8] sm:$0xff]
  %v28 = vld [vmem:[%s0 + $0x10] sm:$0xff]
  %v29 = vld [vmem:[%s0 + $0x18] sm:$0xff]
  %v30 = vld [vmem:[%s0 + $0x20] sm:$0xff]
  %v31 = vld [vmem:[%s0 + $0x28] sm:$0xff]
  %v32 = vld [vmem:[%s0 + $0x30] sm:$0xff]
  %v33 = vld [vmem:[%s0 + $0x38] sm:$0xff]
  %v34 = vld [vmem:[%s3] sm:$0xff]
  %v35 = vld [vmem:[%s3 + $0x8] sm:$0xff]
  %v36 = vld [vmem:[%s3 + $0x10] sm:$0xff]
  %v37 = vld [vmem:[%s3 + $0x18] sm:$0xff]
  %v38 = vld [vmem:[%s3 + $0x20] sm:$0xff]
  %v39 = vld [vmem:[%s3 + $0x28] sm:$0xff]
  %v40 = vld [vmem:[%s3 + $0x30] sm:$0xff]
  %v41 = vld [vmem:[%s3 + $0x38] sm:$0xff]
  %v42 = vld [vmem:[%s3 + $0x40] sm:$0xff]
  %v43 = vld [vmem:[%s3 + $0x48] sm:$0xff]
  %v44 = vld [vmem:[%s3 + $0x50] sm:$0xff]
  %v45 = vld [vmem:[%s3 + $0x58] sm:$0xff]
  %v46 = vld [vmem:[%s3 + $0x60] sm:$0xf]
  %v47 = vld [vmem:[%s1] sm:$0xff]
  %v48 = vld [vmem:[%s1 + $0x8] sm:$0xff]
  %v49 = vld [vmem:[%s1 + $0x10] sm:$0xff]
  %v50 = vld [vmem:[%s1 + $0x18] sm:$0xff]
  %v51 = vld [vmem:[%s1 + $0x20] sm:$0xff]
  %v52 = vld [vmem:[%s1 + $0x28] sm:$0xff]
  %v53 = vld [vmem:[%s1 + $0x30] sm:$0xff]
  %v54 = vld [vmem:[%s1 + $0x38] sm:$0xff]
  %v55 = vld [vmem:[%s4] sm:$0xff]
  %v56 = vld [vmem:[%s4 + $0x8] sm:$0xff]
  %v57 = vld [vmem:[%s4 + $0x10] sm:$0xff]
  %v58 = vld [vmem:[%s4 + $0x18] sm:$0xff]
  %v59 = vld [vmem:[%s4 + $0x20] sm:$0xff]
  %v60 = vld [vmem:[%s4 + $0x28] sm:$0xff]
  %v61 = vld [vmem:[%s4 + $0x30] sm:$0xff]
  %v62 = vld [vmem:[%s4 + $0x38] sm:$0xff]
  %v63 = vld [vmem:[%s4 + $0x40] sm:$0xff]
  %v64 = vld [vmem:[%s4 + $0x48] sm:$0xff]
  %v65 = vld [vmem:[%s4 + $0x50] sm:$0xff]
  %v66 = vld [vmem:[%s4 + $0x58] sm:$0xff]
  %v67 = vld [vmem:[%s4 + $0x60] sm:$0xf]
  %vm68 = vcmask 818176
  %v70 = vsel %vm68, %v47, 0
  %v73 = vsel %vm68, %v48, 0
  %v76 = vsel %vm68, %v49, 0
  %v79 = vsel %vm68, %v50, 0
  %v82 = vsel %vm68, %v51, 0
  %v85 = vsel %vm68, %v52, 0
  %v88 = vsel %vm68, %v53, 0
  %v91 = vsel %vm68, %v54, 0
  %vm93 = vcmask 1043456
  %v95 = vsel %vm93, %v67, 0
  %97 = vmatprep.subr.mxu0 0.0
  %98 = vmatpush1.msra.mxu0 %v55
  %99 = vmatprep.subr.mxu0 0.0
  %100 = vmatpush1.msra.mxu0 %v56
  %101 = vmatprep.subr.mxu0 0.0
  %102 = vmatpush1.msra.mxu0 %v57
  %103 = vmatprep.subr.mxu0 0.0
  %104 = vmatpush1.msra.mxu0 %v58
  %105 = vmatprep.subr.mxu0 0.0
  %106 = vmatpush1.msra.mxu0 %v59
  %107 = vmatprep.subr.mxu0 0.0
  %108 = vmatpush1.msra.mxu0 %v60
  %109 = vmatprep.subr.mxu0 0.0
  %110 = vmatpush1.msra.mxu0 %v61
  %111 = vmatprep.subr.mxu0 0.0
  %112 = vmatpush1.msra.mxu0 %v62
  %113 = vmatprep.subr.mxu0 0.0
  %114 = vmatpush1.msra.mxu0 %v63
  %115 = vmatprep.subr.mxu0 0.0
  %116 = vmatpush1.msra.mxu0 %v64
  %117 = vmatprep.subr.mxu0 0.0
  %118 = vmatpush1.msra.mxu0 %v65
  %119 = vmatprep.subr.mxu0 0.0
  %120 = vmatpush1.msra.mxu0 %v66
  %121 = vmatprep.subr.mxu0 0.0
  %122 = vmatpush1.msra.mxu0 %v95
  %123 = vmatprep.subr.mxu0 0.0
  %124 = vmatpush1.msra.mxu0 0.0
  %125 = vmatprep.subr.mxu0 0.0
  %126 = vmatpush1.msra.mxu0 0.0
  %127 = vmatprep.subr.mxu0 0.0
  %128 = vmatpush1.msra.mxu0 0.0
  %129 = vmatprep.subr.mxu0 0.0
  %130 = vmatpush1.msra.mxu0 0.0
  %131 = vmatprep.subr.mxu0 0.0
  %132 = vmatpush1.msra.mxu0 0.0
  %133 = vmatprep.subr.mxu0 0.0
  %134 = vmatpush1.msra.mxu0 0.0
  %135 = vmatprep.subr.mxu0 0.0
  %136 = vmatpush1.msra.mxu0 0.0
  %137 = vmatprep.subr.mxu0 0.0
  %138 = vmatpush1.msra.mxu0 0.0
  %139 = vmatprep.subr.mxu0 0.0
  %140 = vmatpush1.msra.mxu0 0.0
  %141 = vmatprep.subr.mxu0 0.0
  %142 = vmatpush1.msra.mxu0 0.0
  %143 = vmatprep.subr.mxu0 0.0
  %144 = vmatpush1.msra.mxu0 0.0
  %145 = vmatprep.subr.mxu0 0.0
  %146 = vmatpush1.msra.mxu0 0.0
  %147 = vmatprep.subr.mxu0 0.0
  %148 = vmatpush1.msra.mxu0 0.0
  %149 = vmatprep.subr.mxu0 0.0
  %150 = vmatpush1.msra.mxu0 0.0
  %151 = vmatprep.subr.mxu0 0.0
  %152 = vmatpush1.msra.mxu0 0.0
  %153 = vmatprep.subr.mxu0 0.0
  %154 = vmatpush1.msra.mxu0 0.0
  %155 = vmatprep.subr.mxu0 0.0
  %156 = vmatpush1.msra.mxu0 0.0
  %157 = vmatprep.subr.mxu0 0.0
  %158 = vmatpush1.msra.mxu0 0.0
  %159 = vmatprep.subr.mxu0 0.0
  %160 = vmatpush1.msra.mxu0 0.0
  %161 = vmatprep.mubr.f32.mxu0 0.0
  %162 = vmatmul.mubr.f32.gmra.mrb[0].mxu0 %v70
  %v163 = vpop.f32.mrb[0].mxu0
  %v164 = vadd.f32 0.0, %v163
  %v165 = vpop.f32.mrb[0].mxu0
  %166 = vmatprep.mubr.f32.mxu0 0.0
  %167 = vmatmul.mubr.f32.gmra.mrb[0].mxu0 %v73
  %v168 = vpop.f32.mrb[0].mxu0
  %v169 = vadd.f32 0.0, %v168
  %v170 = vpop.f32.mrb[0].mxu0
  %171 = vmatprep.mubr.f32.mxu0 0.0
  %172 = vmatmul.mubr.f32.gmra.mrb[0].mxu0 %v76
  %v173 = vpop.f32.mrb[0].mxu0
  %v174 = vadd.f32 0.0, %v173
  %v175 = vpop.f32.mrb[0].mxu0
  %176 = vmatprep.mubr.f32.mxu0 0.0
  %177 = vmatmul.mubr.f32.gmra.mrb[0].mxu0 %v79
  %v178 = vpop.f32.mrb[0].mxu0
  %v179 = vadd.f32 0.0, %v178
  %v180 = vpop.f32.mrb[0].mxu0
  %181 = vmatprep.mubr.f32.mxu0 0.0
  %182 = vmatmul.mubr.f32.gmra.mrb[0].mxu0 %v82
  %v183 = vpop.f32.mrb[0].mxu0
  %v184 = vadd.f32 0.0, %v183
  %v185 = vpop.f32.mrb[0].mxu0
  %186 = vmatprep.mubr.f32.mxu0 0.0
  %187 = vmatmul.mubr.f32.gmra.mrb[0].mxu0 %v85
  %v188 = vpop.f32.mrb[0].mxu0
  %v189 = vadd.f32 0.0, %v188
  %v190 = vpop.f32.mrb[0].mxu0
  %191 = vmatprep.mubr.f32.mxu0 0.0
  %192 = vmatmul.mubr.f32.gmra.mrb[0].mxu0 %v88
  %v193 = vpop.f32.mrb[0].mxu0
  %v194 = vadd.f32 0.0, %v193
  %v195 = vpop.f32.mrb[0].mxu0
  %196 = vmatprep.mubr.f32.mxu0 0.0
  %197 = vmatmul.mubr.f32.gmra.mrb[0].mxu0 %v91
  %v198 = vpop.f32.mrb[0].mxu0
  %v199 = vadd.f32 0.0, %v198
  %v200 = vpop.f32.mrb[0].mxu0
  %201 = vdwg.mxu0
  %v203 = vsel %vm68, %v26, 0
  %v206 = vsel %vm68, %v27, 0
  %v209 = vsel %vm68, %v28, 0
  %v212 = vsel %vm68, %v29, 0
  %v215 = vsel %vm68, %v30, 0
  %v218 = vsel %vm68, %v31, 0
  %v221 = vsel %vm68, %v32, 0
  %v224 = vsel %vm68, %v33, 0
  %v227 = vsel %vm93, %v46, 0
  %229 = vmatprep.subr.mxu0 0.0
  %230 = vmatpush1.msra.mxu0 %v34
  %231 = vmatprep.subr.mxu0 0.0
  %232 = vmatpush1.msra.mxu0 %v35
  %233 = vmatprep.subr.mxu0 0.0
  %234 = vmatpush1.msra.mxu0 %v36
  %235 = vmatprep.subr.mxu0 0.0
  %236 = vmatpush1.msra.mxu0 %v37
  %237 = vmatprep.subr.mxu0 0.0
  %238 = vmatpush1.msra.mxu0 %v38
  %239 = vmatprep.subr.mxu0 0.0
  %240 = vmatpush1.msra.mxu0 %v39
  %241 = vmatprep.subr.mxu0 0.0
  %242 = vmatpush1.msra.mxu0 %v40
  %243 = vmatprep.subr.mxu0 0.0
  %244 = vmatpush1.msra.mxu0 %v41
  %245 = vmatprep.subr.mxu0 0.0
  %246 = vmatpush1.msra.mxu0 %v42
  %247 = vmatprep.subr.mxu0 0.0
  %248 = vmatpush1.msra.mxu0 %v43
  %249 = vmatprep.subr.mxu0 0.0
  %250 = vmatpush1.msra.mxu0 %v44
  %251 = vmatprep.subr.mxu0 0.0
  %252 = vmatpush1.msra.mxu0 %v45
  %253 = vmatprep.subr.mxu0 0.0
  %254 = vmatpush1.msra.mxu0 %v227
  %255 = vmatprep.subr.mxu0 0.0
  %256 = vmatpush1.msra.mxu0 0.0
  %257 = vmatprep.subr.mxu0 0.0
  %258 = vmatpush1.msra.mxu0 0.0
  %259 = vmatprep.subr.mxu0 0.0
  %260 = vmatpush1.msra.mxu0 0.0
  %261 = vmatprep.subr.mxu0 0.0
  %262 = vmatpush1.msra.mxu0 0.0
  %263 = vmatprep.subr.mxu0 0.0
  %264 = vmatpush1.msra.mxu0 0.0
  %265 = vmatprep.subr.mxu0 0.0
  %266 = vmatpush1.msra.mxu0 0.0
  %267 = vmatprep.subr.mxu0 0.0
  %268 = vmatpush1.msra.mxu0 0.0
  %269 = vmatprep.subr.mxu0 0.0
  %270 = vmatpush1.msra.mxu0 0.0
  %271 = vmatprep.subr.mxu0 0.0
  %272 = vmatpush1.msra.mxu0 0.0
  %273 = vmatprep.subr.mxu0 0.0
  %274 = vmatpush1.msra.mxu0 0.0
  %275 = vmatprep.subr.mxu0 0.0
  %276 = vmatpush1.msra.mxu0 0.0
  %277 = vmatprep.subr.mxu0 0.0
  %278 = vmatpush1.msra.mxu0 0.0
  %279 = vmatprep.subr.mxu0 0.0
  %280 = vmatpush1.msra.mxu0 0.0
  %281 = vmatprep.subr.mxu0 0.0
  %282 = vmatpush1.msra.mxu0 0.0
  %283 = vmatprep.subr.mxu0 0.0
  %284 = vmatpush1.msra.mxu0 0.0
  %285 = vmatprep.subr.mxu0 0.0
  %286 = vmatpush1.msra.mxu0 0.0
  %287 = vmatprep.subr.mxu0 0.0
  %288 = vmatpush1.msra.mxu0 0.0
  %289 = vmatprep.subr.mxu0 0.0
  %290 = vmatpush1.msra.mxu0 0.0
  %291 = vmatprep.subr.mxu0 0.0
  %292 = vmatpush1.msra.mxu0 0.0
  %293 = vmatprep.mubr.f32.mxu0 0.0
  %294 = vmatmul.mubr.f32.gmra.mrb[0].mxu0 %v203
  %v295 = vpop.f32.mrb[0].mxu0
  %v296 = vadd.f32 %v164, %v295
  %v297 = vpop.f32.mrb[0].mxu0
  %298 = vmatprep.mubr.f32.mxu0 0.0
  %299 = vmatmul.mubr.f32.gmra.mrb[0].mxu0 %v206
  %v300 = vpop.f32.mrb[0].mxu0
  %v301 = vadd.f32 %v169, %v300
  %v302 = vpop.f32.mrb[0].mxu0
  %303 = vmatprep.mubr.f32.mxu0 0.0
  %304 = vmatmul.mubr.f32.gmra.mrb[0].mxu0 %v209
  %v305 = vpop.f32.mrb[0].mxu0
  %v306 = vadd.f32 %v174, %v305
  %v307 = vpop.f32.mrb[0].mxu0
  %308 = vmatprep.mubr.f32.mxu0 0.0
  %309 = vmatmul.mubr.f32.gmra.mrb[0].mxu0 %v212
  %v310 = vpop.f32.mrb[0].mxu0
  %v311 = vadd.f32 %v179, %v310
  %v312 = vpop.f32.mrb[0].mxu0
  %313 = vmatprep.mubr.f32.mxu0 0.0
  %314 = vmatmul.mubr.f32.gmra.mrb[0].mxu0 %v215
  %v315 = vpop.f32.mrb[0].mxu0
  %v316 = vadd.f32 %v184, %v315
  %v317 = vpop.f32.mrb[0].mxu0
  %318 = vmatprep.mubr.f32.mxu0 0.0
  %319 = vmatmul.mubr.f32.gmra.mrb[0].mxu0 %v218
  %v320 = vpop.f32.mrb[0].mxu0
  %v321 = vadd.f32 %v189, %v320
  %v322 = vpop.f32.mrb[0].mxu0
  %323 = vmatprep.mubr.f32.mxu0 0.0
  %324 = vmatmul.mubr.f32.gmra.mrb[0].mxu0 %v221
  %v325 = vpop.f32.mrb[0].mxu0
  %v326 = vadd.f32 %v194, %v325
  %v327 = vpop.f32.mrb[0].mxu0
  %328 = vmatprep.mubr.f32.mxu0 0.0
  %329 = vmatmul.mubr.f32.gmra.mrb[0].mxu0 %v224
  %v330 = vpop.f32.mrb[0].mxu0
  %v331 = vadd.f32 %v199, %v330
  %v332 = vpop.f32.mrb[0].mxu0
  %333 = vdwg.mxu0
  %v334 = vld [vmem:[%s2] sm:$0xff]
  %v335 = vld [vmem:[%s2 + $0x8] sm:$0xff]
  %v336 = vld [vmem:[%s2 + $0x10] sm:$0xff]
  %v337 = vld [vmem:[%s2 + $0x18] sm:$0xff]
  %v338 = vld [vmem:[%s2 + $0x20] sm:$0xff]
  %v339 = vld [vmem:[%s2 + $0x28] sm:$0xff]
  %v340 = vld [vmem:[%s2 + $0x30] sm:$0xff]
  %v341 = vld [vmem:[%s2 + $0x38] sm:$0xff]
  %v342 = vld [vmem:[%s5] sm:$0xff]
  %v343 = vld [vmem:[%s5 + $0x8] sm:$0xff]
  %v344 = vld [vmem:[%s5 + $0x10] sm:$0xff]
  %v345 = vld [vmem:[%s5 + $0x18] sm:$0xff]
  %v346 = vld [vmem:[%s5 + $0x20] sm:$0xff]
  %v347 = vld [vmem:[%s5 + $0x28] sm:$0xff]
  %v348 = vld [vmem:[%s5 + $0x30] sm:$0xff]
  %v349 = vld [vmem:[%s5 + $0x38] sm:$0xff]
  %v350 = vld [vmem:[%s5 + $0x40] sm:$0xff]
  %v351 = vld [vmem:[%s5 + $0x48] sm:$0xff]
  %v352 = vld [vmem:[%s5 + $0x50] sm:$0xff]
  %v353 = vld [vmem:[%s5 + $0x58] sm:$0xff]
  %v354 = vld [vmem:[%s5 + $0x60] sm:$0xf]
  %v356 = vsel %vm68, %v334, 0
  %v359 = vsel %vm68, %v335, 0
  %v362 = vsel %vm68, %v336, 0
  %v365 = vsel %vm68, %v337, 0
  %v368 = vsel %vm68, %v338, 0
  %v371 = vsel %vm68, %v339, 0
  %v374 = vsel %vm68, %v340, 0
  %v377 = vsel %vm68, %v341, 0
  %v380 = vsel %vm93, %v354, 0
  %382 = vmatprep.subr.mxu0 0.0
  %383 = vmatpush1.msra.mxu0 %v342
  %384 = vmatprep.subr.mxu0 0.0
  %385 = vmatpush1.msra.mxu0 %v343
  %386 = vmatprep.subr.mxu0 0.0
  %387 = vmatpush1.msra.mxu0 %v344
  %388 = vmatprep.subr.mxu0 0.0
  %389 = vmatpush1.msra.mxu0 %v345
  %390 = vmatprep.subr.mxu0 0.0
  %391 = vmatpush1.msra.mxu0 %v346
  %392 = vmatprep.subr.mxu0 0.0
  %393 = vmatpush1.msra.mxu0 %v347
  %394 = vmatprep.subr.mxu0 0.0
  %395 = vmatpush1.msra.mxu0 %v348
  %396 = vmatprep.subr.mxu0 0.0
  %397 = vmatpush1.msra.mxu0 %v349
  %398 = vmatprep.subr.mxu0 0.0
  %399 = vmatpush1.msra.mxu0 %v350
  %400 = vmatprep.subr.mxu0 0.0
  %401 = vmatpush1.msra.mxu0 %v351
  %402 = vmatprep.subr.mxu0 0.0
  %403 = vmatpush1.msra.mxu0 %v352
  %404 = vmatprep.subr.mxu0 0.0
  %405 = vmatpush1.msra.mxu0 %v353
  %406 = vmatprep.subr.mxu0 0.0
  %407 = vmatpush1.msra.mxu0 %v380
  %408 = vmatprep.subr.mxu0 0.0
  %409 = vmatpush1.msra.mxu0 0.0
  %410 = vmatprep.subr.mxu0 0.0
  %411 = vmatpush1.msra.mxu0 0.0
  %412 = vmatprep.subr.mxu0 0.0
  %413 = vmatpush1.msra.mxu0 0.0
  %414 = vmatprep.subr.mxu0 0.0
  %415 = vmatpush1.msra.mxu0 0.0
  %416 = vmatprep.subr.mxu0 0.0
  %417 = vmatpush1.msra.mxu0 0.0
  %418 = vmatprep.subr.mxu0 0.0
  %419 = vmatpush1.msra.mxu0 0.0
  %420 = vmatprep.subr.mxu0 0.0
  %421 = vmatpush1.msra.mxu0 0.0
  %422 = vmatprep.subr.mxu0 0.0
  %423 = vmatpush1.msra.mxu0 0.0
  %424 = vmatprep.subr.mxu0 0.0
  %425 = vmatpush1.msra.mxu0 0.0
  %426 = vmatprep.subr.mxu0 0.0
  %427 = vmatpush1.msra.mxu0 0.0
  %428 = vmatprep.subr.mxu0 0.0
  %429 = vmatpush1.msra.mxu0 0.0
  %430 = vmatprep.subr.mxu0 0.0
  %431 = vmatpush1.msra.mxu0 0.0
  %432 = vmatprep.subr.mxu0 0.0
  %433 = vmatpush1.msra.mxu0 0.0
  %434 = vmatprep.subr.mxu0 0.0
  %435 = vmatpush1.msra.mxu0 0.0
  %436 = vmatprep.subr.mxu0 0.0
  %437 = vmatpush1.msra.mxu0 0.0
  %438 = vmatprep.subr.mxu0 0.0
  %439 = vmatpush1.msra.mxu0 0.0
  %440 = vmatprep.subr.mxu0 0.0
  %441 = vmatpush1.msra.mxu0 0.0
  %442 = vmatprep.subr.mxu0 0.0
  %443 = vmatpush1.msra.mxu0 0.0
  %444 = vmatprep.subr.mxu0 0.0
  %445 = vmatpush1.msra.mxu0 0.0
  %446 = vmatprep.mubr.f32.mxu0 0.0
  %447 = vmatmul.mubr.f32.gmra.mrb[0].mxu0 %v356
  %v448 = vpop.f32.mrb[0].mxu0
  %v449 = vadd.f32 0.0, %v448
  %v450 = vpop.f32.mrb[0].mxu0
  %451 = vmatprep.mubr.f32.mxu0 0.0
  %452 = vmatmul.mubr.f32.gmra.mrb[0].mxu0 %v359
  %v453 = vpop.f32.mrb[0].mxu0
  %v454 = vadd.f32 0.0, %v453
  %v455 = vpop.f32.mrb[0].mxu0
  %456 = vmatprep.mubr.f32.mxu0 0.0
  %457 = vmatmul.mubr.f32.gmra.mrb[0].mxu0 %v362
  %v458 = vpop.f32.mrb[0].mxu0
  %v459 = vadd.f32 0.0, %v458
  %v460 = vpop.f32.mrb[0].mxu0
  %461 = vmatprep.mubr.f32.mxu0 0.0
  %462 = vmatmul.mubr.f32.gmra.mrb[0].mxu0 %v365
  %v463 = vpop.f32.mrb[0].mxu0
  %v464 = vadd.f32 0.0, %v463
  %v465 = vpop.f32.mrb[0].mxu0
  %466 = vmatprep.mubr.f32.mxu0 0.0
  %467 = vmatmul.mubr.f32.gmra.mrb[0].mxu0 %v368
  %v468 = vpop.f32.mrb[0].mxu0
  %v469 = vadd.f32 0.0, %v468
  %v470 = vpop.f32.mrb[0].mxu0
  %471 = vmatprep.mubr.f32.mxu0 0.0
  %472 = vmatmul.mubr.f32.gmra.mrb[0].mxu0 %v371
  %v473 = vpop.f32.mrb[0].mxu0
  %v474 = vadd.f32 0.0, %v473
  %v475 = vpop.f32.mrb[0].mxu0
  %476 = vmatprep.mubr.f32.mxu0 0.0
  %477 = vmatmul.mubr.f32.gmra.mrb[0].mxu0 %v374
  %v478 = vpop.f32.mrb[0].mxu0
  %v479 = vadd.f32 0.0, %v478
  %v480 = vpop.f32.mrb[0].mxu0
  %481 = vmatprep.mubr.f32.mxu0 0.0
  %482 = vmatmul.mubr.f32.gmra.mrb[0].mxu0 %v377
  %v483 = vpop.f32.mrb[0].mxu0
  %v484 = vadd.f32 0.0, %v483
  %v485 = vpop.f32.mrb[0].mxu0
  %486 = vdwg.mxu0
  %v487 = vadd.f32 %v296, %v449
  %v488 = vadd.f32 %v301, %v454
  %v489 = vadd.f32 %v306, %v459
  %v490 = vadd.f32 %v311, %v464
  %v491 = vadd.f32 %v316, %v469
  %v492 = vadd.f32 %v321, %v474
  %v493 = vadd.f32 %v326, %v479
  %v494 = vadd.f32 %v331, %v484
  %v495 = vld [vmem:[%s6] sm:$0x1]
  %v497 = vlaneseq
  %v498 = vshrl.u32 %v497, 7
  %v499 = vsub.s32 0, %v498
  %v500 = vrot.slane %v495, %v499
  %v502 = vadd.f32 %v487, %v500
  %v503 = vadd.f32 %v488, %v500
  %v504 = vadd.f32 %v489, %v500
  %v505 = vadd.f32 %v490, %v500
  %v506 = vadd.f32 %v491, %v500
  %v507 = vadd.f32 %v492, %v500
  %v508 = vadd.f32 %v493, %v500
  %v509 = vadd.f32 %v494, %v500
  %vm510 = vcmask 39936
  %511 = vst.msk [vmem:[%s7] sm:$0xff] %vm510, %v502
  %512 = vst.msk [vmem:[%s7 + $0x8] sm:$0xff] %vm510, %v503
  %513 = vst.msk [vmem:[%s7 + $0x10] sm:$0xff] %vm510, %v504
  %514 = vst.msk [vmem:[%s7 + $0x18] sm:$0xff] %vm510, %v505
  %515 = vst.msk [vmem:[%s7 + $0x20] sm:$0xff] %vm510, %v506
  %516 = vst.msk [vmem:[%s7 + $0x28] sm:$0xff] %vm510, %v507
  %517 = vst.msk [vmem:[%s7 + $0x30] sm:$0xff] %vm510, %v508
  %518 = vst.msk [vmem:[%s7 + $0x38] sm:$0xff] %vm510, %v509
  // Predicated region
  $region30: #{tpu_custom_call.1} parent=0 // pred_check
    _
  $region31: #{tpu_custom_call.1} parent=0 // pred_check_branch
    %520 = sbr.rel (0) target = $region33
  $region32: #{tpu_custom_call.1} parent=0 // pred_region
    _
  $region33: #{tpu_custom_call.1} parent=0 // pred_fallthru
    _
  // Predicated region
  $region34: #{tpu_custom_call.1} parent=0 // pred_check
    _
  $region35: #{tpu_custom_call.1} parent=0 // pred_check_branch
    %522 = sbr.rel (0) target = $region37
  $region36: #{tpu_custom_call.1} parent=0 // pred_region
    _
  $region37: #{tpu_custom_call.1} parent=0 // pred_fallthru
    _

</llo_original>
